<compile_context>
chip_gen: v5e
topology: v5e:2x2
jax: 0.10.0
libtpu: 0.0.40
codegen_flags: <defaults>
</compile_context>

<pallas_src>
import functools

import jax
import jax.numpy as jnp
from jax.experimental import pallas as pl
from jax.experimental.pallas import tpu as pltpu


ACTION_SPACE = 47  # Mortal's action space size


# ----------------------------- Pallas kernel ---------------------------------

def _dqn_kernel(phi_ref, mask_ref, w_ref, b_ref, q_ref, *, v_lane):
    """One batch tile of the dueling head.

    phi:  (TB, F)  bf16
    mask: (TB, AP) int8   (0/1; lanes >= ACTION_SPACE are 0)
    w:    (F, AP)  bf16   advantage head in lanes [0, A); value head in lane A
    b:    (1, AP)  f32
    q:    (TB, AP) f32    lanes >= A come out as -inf and are sliced off outside
    """
    m = mask_ref[...].astype(jnp.float32)                                # (TB, AP)
    out = jnp.dot(phi_ref[...], w_ref[...],
                  preferred_element_type=jnp.float32) + b_ref[...]       # (TB, AP)

    # Value head lives in lane `v_lane`: one-hot select + lane reduce (XLU),
    # then it broadcasts back over lanes for free in the q expression.
    lane = jax.lax.broadcasted_iota(jnp.int32, out.shape, 1)
    v = jnp.sum(jnp.where(lane == v_lane, out, 0.0), axis=-1, keepdims=True)

    a_sum = jnp.sum(out * m, axis=-1, keepdims=True)         # masked advantage sum
    m_sum = jnp.maximum(jnp.sum(m, axis=-1, keepdims=True), 1.0)
    a_mean = a_sum * pl.reciprocal(m_sum, approx=True)       # EUP slot (idle here)

    q = v + out - a_mean
    q_ref[...] = jnp.where(m > 0.0, q, -jnp.inf).astype(q_ref.dtype)


# ----------------------------- params / packing -------------------------------

def init_params(key, feat, action_space):
    k1, k2, k3 = jax.random.split(key, 3)
    return dict(
        v_w=(0.1 * jax.random.normal(k1, (1, feat))).astype(jnp.float32),
        v_b=jnp.zeros((1,), jnp.float32),
        a_w=(0.1 * jax.random.normal(k2, (action_space, feat))).astype(jnp.float32),
        a_b=(0.05 * jax.random.normal(k3, (action_space,))).astype(jnp.float32),
    )


def pack_dqn_params(params):
    """Pack both heads into one lane-dense (F, AP) weight block.

    Lanes [0, A): advantage head; lane A: value head; remaining lanes zero.
    Call ONCE at load time (outside the jitted forward path)."""
    a_w = jnp.asarray(params["a_w"], jnp.float32)        # (A, F) torch layout
    v_w = jnp.asarray(params["v_w"], jnp.float32)        # (1, F)
    a_b = jnp.asarray(params["a_b"], jnp.float32)        # (A,)
    v_b = jnp.asarray(params["v_b"], jnp.float32)        # (1,)
    A, F = a_w.shape
    AP = ((A + 1 + 127) // 128) * 128                    # lane-dense, >=1 spare lane
    w = jnp.zeros((F, AP), jnp.float32)
    w = w.at[:, :A].set(a_w.T).at[:, A].set(v_w[0])
    b = jnp.zeros((AP,), jnp.float32)
    b = b.at[:A].set(a_b).at[A].set(v_b[0])
    return w.astype(jnp.bfloat16), b[None, :]            # (F, AP) bf16, (1, AP) f32


# ----------------------------- wrapper ----------------------------------------

def dqn_forward(phi, mask, w_packed, b_packed, *, block_batch=512):
    """phi: (N, F) float; mask: (N, A) bool; packed weights from pack_dqn_params."""
    N, F = phi.shape
    A = mask.shape[-1]
    AP = w_packed.shape[-1]
    assert F == w_packed.shape[0] and A < AP

    # Row padding only to the next multiple of 8 (no copy for aligned batches).
    Ns = ((N + 7) // 8) * 8
    phi_bf = phi.astype(jnp.bfloat16)
    if Ns != N:
        phi_bf = jnp.pad(phi_bf, ((0, Ns - N), (0, 0)))

    # int8 mask, zero-padded to the lane-dense AP width (tiny buffer).
    mask_p = jnp.zeros((Ns, AP), jnp.int8).at[:N, :A].set(mask.astype(jnp.int8))

    # Batch tile: large enough to amortize per-grid-step overhead, but keep >=2
    # grid steps for big batches so both TensorCores are used on v7x.
    TB = min(block_batch, Ns)
    if Ns >= 256 and Ns <= TB:
        TB = ((pl.cdiv(Ns, 2) + 7) // 8) * 8
    grid = (pl.cdiv(Ns, TB),)

    q_pad = pl.pallas_call(
        functools.partial(_dqn_kernel, v_lane=A),
        out_shape=jax.ShapeDtypeStruct((Ns, AP), jnp.float32),
        grid=grid,
        in_specs=[
            pl.BlockSpec((TB, F), lambda n: (n, 0)),      # phi tile (bf16)
            pl.BlockSpec((TB, AP), lambda n: (n, 0)),     # mask tile (int8)
            pl.BlockSpec((F, AP), lambda n: (0, 0)),      # resident packed weights
            pl.BlockSpec((1, AP), lambda n: (0, 0)),      # resident bias
        ],
        out_specs=pl.BlockSpec((TB, AP), lambda n: (n, 0)),
        compiler_params=pltpu.CompilerParams(
            dimension_semantics=("parallel",)),
    )(phi_bf, mask_p, w_packed, b_packed)

    return q_pad[:N, :A]


# ----------------------------- reference --------------------------------------

def _ref_forward(phi, mask, p):
    """Pure-JAX f32 reference mirroring PyTorch DQN.forward (version=1)."""
    v = phi @ p["v_w"].T + p["v_b"]                       # (N, 1)
    a = phi @ p["a_w"].T + p["a_b"]                       # (N, A)
    a_sum = jnp.sum(jnp.where(mask, a, 0.0), axis=-1, keepdims=True)
    mask_sum = jnp.sum(mask.astype(jnp.float32), axis=-1, keepdims=True)
    a_mean = a_sum / mask_sum
    return jnp.where(mask, v + a - a_mean, -jnp.inf)


# ----------------------------- main --------------------------------------------

if __name__ == "__main__":
    N, F = 32, 512   # version=1: phi is the 512-d feature vector

    key = jax.random.PRNGKey(0)
    kx, km, kp = jax.random.split(key, 3)
    phi = jax.random.normal(kx, (N, F), dtype=jnp.float32)
    mask = jax.random.bernoulli(km, 0.6, (N, ACTION_SPACE))
    mask = mask.at[:, 0].set(True)   # at least one legal action per row
    params = init_params(kp, F, ACTION_SPACE)

    w_packed, b_packed = pack_dqn_params(params)          # pack once, outside jit
    fwd = jax.jit(dqn_forward)
    q = jax.block_until_ready(fwd(phi, mask, w_packed, b_packed))

    assert q.shape == (N, ACTION_SPACE), q.shape
    ref = _ref_forward(phi, mask, params)
    finite = jnp.isfinite(ref)
    assert bool(jnp.all(jnp.isfinite(q) == finite))
    q_f = jnp.where(finite, q, 0.0)
    assert bool(jnp.all(~jnp.isnan(q_f)))                 # no NaN on legal actions
    # bf16 matmul inputs (f32 accumulation): loose tolerance vs the f32 reference.
    max_err = float(jnp.max(jnp.where(finite, jnp.abs(q - ref), 0.0)))
    assert max_err < 0.15, max_err
    print("KERNEL_OK")
</pallas_src>

<mosaic_0001>
module attributes {stable_mosaic.version = 11 : i64} {
  func.func @_dqn_kernel(%arg0: i32, %arg1: memref<32x512xbf16, #tpu.memory_space<vmem>>, %arg2: memref<32x128xi8, #tpu.memory_space<vmem>>, %arg3: memref<512x128xbf16, #tpu.memory_space<vmem>>, %arg4: memref<1x128xf32, #tpu.memory_space<vmem>>, %arg5: memref<32x128xf32, #tpu.memory_space<vmem>>) attributes {dimension_semantics = [#tpu.dimension_semantics<parallel>], iteration_bounds = array<i64: 1>, scalar_prefetch = 0 : i64, scratch_operands = 0 : i64, tpu.core_type = #tpu.core_type<tc>, window_params = [{transform_indices = @transform_0, window_bounds = array<i64: 32, 512>}, {transform_indices = @transform_1, window_bounds = array<i64: 32, 128>}, {pipeline_mode = #tpu.pipeline_mode<synchronous>, transform_indices = @transform_2, window_bounds = array<i64: 512, 128>}, {pipeline_mode = #tpu.pipeline_mode<synchronous>, transform_indices = @transform_3, window_bounds = array<i64: 1, 128>}, {transform_indices = @transform_4, window_bounds = array<i64: 32, 128>}]} {
    %c0 = arith.constant 0 : index
    %c0_0 = arith.constant 0 : index
    %0 = vector.load %arg2[%c0, %c0_0] : memref<32x128xi8, #tpu.memory_space<vmem>>, vector<32x128xi8>
    %1 = arith.sitofp %0 : vector<32x128xi8> to vector<32x128xf32>
    %c0_1 = arith.constant 0 : index
    %c0_2 = arith.constant 0 : index
    %2 = vector.load %arg1[%c0_1, %c0_2] : memref<32x512xbf16, #tpu.memory_space<vmem>>, vector<32x512xbf16>
    %c0_3 = arith.constant 0 : index
    %c0_4 = arith.constant 0 : index
    %3 = vector.load %arg3[%c0_3, %c0_4] : memref<512x128xbf16, #tpu.memory_space<vmem>>, vector<512x128xbf16>
    %cst = arith.constant dense<0.000000e+00> : vector<32x128xf32>
    %4 = tpu.matmul %2, %3, %cst {dimension_numbers = #tpu.dot_dimension_numbers<[1], [0], [0], [1], [0, 0, 1, 1], [], []>} : vector<32x512xbf16>, vector<512x128xbf16>, vector<32x128xf32> -> vector<32x128xf32>
    %c0_5 = arith.constant 0 : index
    %c0_6 = arith.constant 0 : index
    %5 = vector.load %arg4[%c0_5, %c0_6] : memref<1x128xf32, #tpu.memory_space<vmem>>, vector<1x128xf32>
    %6 = vector.broadcast %5 : vector<1x128xf32> to vector<32x128xf32>
    %7 = arith.addf %4, %6 : vector<32x128xf32>
    %8 = tpu.iota {dimensions = array<i32: 1>} : vector<32x128xi32>
    %c47_i32 = arith.constant 47 : i32
    %9 = vector.broadcast %c47_i32 : i32 to vector<32x128xi32>
    %10 = arith.cmpi eq, %8, %9 : vector<32x128xi32>
    %cst_7 = arith.constant 0.000000e+00 : f32
    %11 = vector.broadcast %cst_7 : f32 to vector<32x128xf32>
    %12 = arith.select %10, %7, %11 : vector<32x128xi1>, vector<32x128xf32>
    %cst_8 = arith.constant dense<0.000000e+00> : vector<32xf32>
    %13 = vector.multi_reduction <add>, %12, %cst_8 [1] : vector<32x128xf32> to vector<32xf32>
    %14 = vector.shape_cast %13 : vector<32xf32> to vector<32x1xf32>
    %15 = arith.mulf %7, %1 : vector<32x128xf32>
    %cst_9 = arith.constant dense<0.000000e+00> : vector<32xf32>
    %16 = vector.multi_reduction <add>, %15, %cst_9 [1] : vector<32x128xf32> to vector<32xf32>
    %17 = vector.shape_cast %16 : vector<32xf32> to vector<32x1xf32>
    %cst_10 = arith.constant dense<0.000000e+00> : vector<32xf32>
    %18 = vector.multi_reduction <add>, %1, %cst_10 [1] : vector<32x128xf32> to vector<32xf32>
    %19 = vector.shape_cast %18 : vector<32xf32> to vector<32x1xf32>
    %cst_11 = arith.constant 1.000000e+00 : f32
    %20 = vector.broadcast %cst_11 : f32 to vector<32x1xf32>
    %21 = arith.maximumf %19, %20 : vector<32x1xf32>
    %22 = tpu.reciprocal %21 {approx = true} : vector<32x1xf32> -> vector<32x1xf32>
    %23 = arith.mulf %17, %22 : vector<32x1xf32>
    %24 = vector.broadcast %14 : vector<32x1xf32> to vector<32x128xf32>
    %25 = arith.addf %24, %7 : vector<32x128xf32>
    %26 = vector.broadcast %23 : vector<32x1xf32> to vector<32x128xf32>
    %27 = arith.subf %25, %26 : vector<32x128xf32>
    %cst_12 = arith.constant 0.000000e+00 : f32
    %28 = vector.broadcast %cst_12 : f32 to vector<32x128xf32>
    %29 = arith.cmpf ogt, %1, %28 : vector<32x128xf32>
    %cst_13 = arith.constant 0xFF800000 : f32
    %30 = vector.broadcast %cst_13 : f32 to vector<32x128xf32>
    %31 = arith.select %29, %27, %30 : vector<32x128xi1>, vector<32x128xf32>
    %c0_14 = arith.constant 0 : index
    %c0_15 = arith.constant 0 : index
    %32 = vector.load %arg5[%c0_14, %c0_15] : memref<32x128xf32, #tpu.memory_space<vmem>>, vector<32x128xf32>
    tpu.vector_store %arg5[%c0_14, %c0_15], %31 {strides = array<i32>} : memref<32x128xf32, #tpu.memory_space<vmem>>, vector<32x128xf32>,
    return
  }
  func.func @transform_0(%arg0: i32) -> (i32, i32) {
    %c0_i32 = arith.constant 0 : i32
    %c0_i32_0 = arith.constant 0 : i32
    return %arg0, %c0_i32 : i32, i32
  }
  func.func @transform_1(%arg0: i32) -> (i32, i32) {
    %c0_i32 = arith.constant 0 : i32
    %c0_i32_0 = arith.constant 0 : i32
    return %arg0, %c0_i32 : i32, i32
  }
  func.func @transform_2(%arg0: i32) -> (i32, i32) {
    %c0_i32 = arith.constant 0 : i32
    %c0_i32_0 = arith.constant 0 : i32
    %c0_i32_1 = arith.constant 0 : i32
    return %c0_i32, %c0_i32_0 : i32, i32
  }
  func.func @transform_3(%arg0: i32) -> (i32, i32) {
    %c0_i32 = arith.constant 0 : i32
    %c0_i32_0 = arith.constant 0 : i32
    %c0_i32_1 = arith.constant 0 : i32
    return %c0_i32, %c0_i32_0 : i32, i32
  }
  func.func @transform_4(%arg0: i32) -> (i32, i32) {
    %c0_i32 = arith.constant 0 : i32
    %c0_i32_0 = arith.constant 0 : i32
    return %arg0, %c0_i32 : i32, i32
  }
}

</mosaic_0001>

<llo_original>
// kernel: dqn_forward.1
$region0: #{dqn_forward.1}
  #allocation0 [shape = 'u32[]', space=smem, size = 0x4, offset = 0x4, fixed_abs, tag = 'smem constant byte address 0x4 - core index']
  #allocation1 [shape = 'u32[72,128]{1,0:T(1,128)}', space=vmem, size = 0x9000, scoped, tag = 'internal scratch']
  %s0 = inlined_call_operand.vmem [shape: bf16[32,512], index: 0, kind: input, shape index: {}]
  %s1 = inlined_call_operand.vmem [shape: s8[32,128], index: 1, kind: input, shape index: {}]
  %s2 = inlined_call_operand.hbm [shape: bf16[512,128], index: 2, kind: input, shape index: {}]
  %s3 = inlined_call_operand.vmem [shape: f32[1,128], index: 3, kind: input, shape index: {}]
  %s4 = inlined_call_operand.hbm [shape: f32[32,128], index: 4, kind: output, shape index: {}]
  %s5 = sld [smem:[#allocation0]]
  $region30: #{dqn_forward.1} parent=0
    _
  %s7 = ssub.s32 1, %s5
  %s8 = scalar_select 0, %s7, %s5
  $region1: #{dqn_forward.1} parent=0
    #allocation2 [shape = 'u8[131072]{0}', space=vmem, size = 0x20000, scoped, tag = 'input window, operand 2, single buffered']
    #allocation3 [shape = 's32[1]{0}', space=sflag, size = 0x4, scoped, tag = 'scoped memory for dqn_forward.1']
    #allocation4 [shape = 's32[1]{0}', space=sflag, size = 0x4, scoped, tag = 'scoped memory for dqn_forward.1']
    #allocation5 [shape = 'u8[16384]{0}', space=vmem, size = 0x4000, scoped, tag = 'output window, operand 0, single buffered']
    %9 = vsyncpa [#allocation3], 0
    %10 = vsyncpa [#allocation4], 0
    // Predicated region
    $region2: #{dqn_forward.1} parent=1 // pred_check
      _
    $region3: #{dqn_forward.1} parent=1 // pred_check_branch
      %12 = sbr.rel (0) target = $region5
    $region4: #{dqn_forward.1} parent=1 // pred_region
      _
    $region5: #{dqn_forward.1} parent=1 // pred_fallthru
      _
    // Predicated region
    $region6: #{dqn_forward.1} parent=1 // pred_check
      _
    $region7: #{dqn_forward.1} parent=1 // pred_check_branch
      %14 = sbr.rel (0) target = $region9
    $region8: #{dqn_forward.1} parent=1 // pred_region
      _
    $region9: #{dqn_forward.1} parent=1 // pred_fallthru
      _
    // Predicated region
    $region10: #{dqn_forward.1} parent=1 // pred_check
      _
    $region11: #{dqn_forward.1} parent=1 // pred_check_branch
      %16 = sbr.rel (0) target = $region13
    $region12: #{dqn_forward.1} parent=1 // pred_region
      %18 = vsyncadd [#allocation3], 0
      %s19 = sshll.u32 %s2, 4
      %s20 = int_to_ptr.hbm [resolvable:$true] %s19
      %s21 = sshll.u32 [#allocation2], 4
      %s22 = int_to_ptr.vmem [resolvable:$true] %s21
      %27 = dma.hbm_to_vmem [thread:$0]  %s20, 4096, %s22, [#allocation3], 64, 64, 4
    $region13: #{dqn_forward.1} parent=1 // pred_fallthru
      _
    // Predicated region
    $region14: #{dqn_forward.1} parent=1 // pred_check
      _
    $region15: #{dqn_forward.1} parent=1 // pred_check_branch
      %29 = sbr.rel (0) target = $region17
    $region16: #{dqn_forward.1} parent=1 // pred_region
      _
    $region17: #{dqn_forward.1} parent=1 // pred_fallthru
      _
    // Predicated region
    $region18: #{dqn_forward.1} parent=1 // pred_check
      _
    $region19: #{dqn_forward.1} parent=1 // pred_check_branch
      %31 = sbr.rel (0) target = $region21
    $region20: #{dqn_forward.1} parent=1 // pred_region
      %33 = dma.done [#allocation3], 4096
    $region21: #{dqn_forward.1} parent=1 // pred_fallthru
      _
    %v34 = vld [vmem:[%s1] sm:$0xff]
    %v35 = vunpack.c.0.s8 %v34
    %v36 = vunpack.c.1.s8 %v34
    %v37 = vunpack.c.2.s8 %v34
    %v38 = vunpack.c.3.s8 %v34
    %v39 = vcvt.s32.f32 %v35
    %v40 = vcvt.s32.f32 %v36
    %v41 = vcvt.s32.f32 %v37
    %v42 = vcvt.s32.f32 %v38
    %v43 = vld [vmem:[%s0] sm:$0xff]
    %v44 = vld [vmem:[%s0 + $0x8] sm:$0xff]
    %v45 = vld [vmem:[%s0 + $0x10] sm:$0xff]
    %v46 = vld [vmem:[%s0 + $0x18] sm:$0xff]
    %v47 = vld [vmem:[%s0 + $0x20] sm:$0xff]
    %v48 = vld [vmem:[%s0 + $0x28] sm:$0xff]
    %v49 = vld [vmem:[%s0 + $0x30] sm:$0xff]
    %v50 = vld [vmem:[%s0 + $0x38] sm:$0xff]
    %v51 = vld [vmem:[#allocation2] sm:$0xf]
    %v52 = vld [vmem:[#allocation2 + $0x4] sm:$0xf]
    %v53 = vld [vmem:[#allocation2 + $0x8] sm:$0xf]
    %v54 = vld [vmem:[#allocation2 + $0xc] sm:$0xf]
    %v55 = vld [vmem:[#allocation2 + $0x10] sm:$0xf]
    %v56 = vld [vmem:[#allocation2 + $0x14] sm:$0xf]
    %v57 = vld [vmem:[#allocation2 + $0x18] sm:$0xf]
    %v58 = vld [vmem:[#allocation2 + $0x1c] sm:$0xf]
    %v59 = vld [vmem:[#allocation2 + $0x20] sm:$0xf]
    %v60 = vld [vmem:[#allocation2 + $0x24] sm:$0xf]
    %v61 = vld [vmem:[#allocation2 + $0x28] sm:$0xf]
    %v62 = vld [vmem:[#allocation2 + $0x2c] sm:$0xf]
    %v63 = vld [vmem:[#allocation2 + $0x30] sm:$0xf]
    %v64 = vld [vmem:[#allocation2 + $0x34] sm:$0xf]
    %v65 = vld [vmem:[#allocation2 + $0x38] sm:$0xf]
    %v66 = vld [vmem:[#allocation2 + $0x3c] sm:$0xf]
    %v67 = vld [vmem:[#allocation2 + $0x40] sm:$0xf]
    %v68 = vld [vmem:[#allocation2 + $0x44] sm:$0xf]
    %v69 = vld [vmem:[#allocation2 + $0x48] sm:$0xf]
    %v70 = vld [vmem:[#allocation2 + $0x4c] sm:$0xf]
    %v71 = vld [vmem:[#allocation2 + $0x50] sm:$0xf]
    %v72 = vld [vmem:[#allocation2 + $0x54] sm:$0xf]
    %v73 = vld [vmem:[#allocation2 + $0x58] sm:$0xf]
    %v74 = vld [vmem:[#allocation2 + $0x5c] sm:$0xf]
    %v75 = vld [vmem:[#allocation2 + $0x60] sm:$0xf]
    %v76 = vld [vmem:[#allocation2 + $0x64] sm:$0xf]
    %v77 = vld [vmem:[#allocation2 + $0x68] sm:$0xf]
    %v78 = vld [vmem:[#allocation2 + $0x6c] sm:$0xf]
    %v79 = vld [vmem:[#allocation2 + $0x70] sm:$0xf]
    %v80 = vld [vmem:[#allocation2 + $0x74] sm:$0xf]
    %v81 = vld [vmem:[#allocation2 + $0x78] sm:$0xf]
    %v82 = vld [vmem:[#allocation2 + $0x7c] sm:$0xf]
    %v83 = vld [vmem:[#allocation2 + $0x80] sm:$0xf]
    %v84 = vld [vmem:[#allocation2 + $0x84] sm:$0xf]
    %v85 = vld [vmem:[#allocation2 + $0x88] sm:$0xf]
    %v86 = vld [vmem:[#allocation2 + $0x8c] sm:$0xf]
    %v87 = vld [vmem:[#allocation2 + $0x90] sm:$0xf]
    %v88 = vld [vmem:[#allocation2 + $0x94] sm:$0xf]
    %v89 = vld [vmem:[#allocation2 + $0x98] sm:$0xf]
    %v90 = vld [vmem:[#allocation2 + $0x9c] sm:$0xf]
    %v91 = vld [vmem:[#allocation2 + $0xa0] sm:$0xf]
    %v92 = vld [vmem:[#allocation2 + $0xa4] sm:$0xf]
    %v93 = vld [vmem:[#allocation2 + $0xa8] sm:$0xf]
    %v94 = vld [vmem:[#allocation2 + $0xac] sm:$0xf]
    %v95 = vld [vmem:[#allocation2 + $0xb0] sm:$0xf]
    %v96 = vld [vmem:[#allocation2 + $0xb4] sm:$0xf]
    %v97 = vld [vmem:[#allocation2 + $0xb8] sm:$0xf]
    %v98 = vld [vmem:[#allocation2 + $0xbc] sm:$0xf]
    %v99 = vld [vmem:[#allocation2 + $0xc0] sm:$0xf]
    %v100 = vld [vmem:[#allocation2 + $0xc4] sm:$0xf]
    %v101 = vld [vmem:[#allocation2 + $0xc8] sm:$0xf]
    %v102 = vld [vmem:[#allocation2 + $0xcc] sm:$0xf]
    %v103 = vld [vmem:[#allocation2 + $0xd0] sm:$0xf]
    %v104 = vld [vmem:[#allocation2 + $0xd4] sm:$0xf]
    %v105 = vld [vmem:[#allocation2 + $0xd8] sm:$0xf]
    %v106 = vld [vmem:[#allocation2 + $0xdc] sm:$0xf]
    %v107 = vld [vmem:[#allocation2 + $0xe0] sm:$0xf]
    %v108 = vld [vmem:[#allocation2 + $0xe4] sm:$0xf]
    %v109 = vld [vmem:[#allocation2 + $0xe8] sm:$0xf]
    %v110 = vld [vmem:[#allocation2 + $0xec] sm:$0xf]
    %v111 = vld [vmem:[#allocation2 + $0xf0] sm:$0xf]
    %v112 = vld [vmem:[#allocation2 + $0xf4] sm:$0xf]
    %v113 = vld [vmem:[#allocation2 + $0xf8] sm:$0xf]
    %v114 = vld [vmem:[#allocation2 + $0xfc] sm:$0xf]
    %v115 = vld [vmem:[%s3] sm:$0x1]
    %v117 = vperm.slane %v115, 0
    %v127 = vunpack.c.l.b16 %v43
    %v128 = vunpack.c.h.b16 %v43
    %v129 = vunpack.c.l.b16 %v44
    %v130 = vunpack.c.h.b16 %v44
    %v131 = vunpack.c.l.b16 %v45
    %v132 = vunpack.c.h.b16 %v45
    %v133 = vunpack.c.l.b16 %v46
    %v134 = vunpack.c.h.b16 %v46
    %v135 = vunpack.c.l.b16 %v47
    %v136 = vunpack.c.h.b16 %v47
    %v137 = vunpack.c.l.b16 %v48
    %v138 = vunpack.c.h.b16 %v48
    %v139 = vunpack.c.l.b16 %v49
    %v140 = vunpack.c.h.b16 %v49
    %v141 = vunpack.c.l.b16 %v50
    %v142 = vunpack.c.h.b16 %v50
    %v143 = vpack.c.b16 %v131, %v127
    %v144 = vpack.c.b16 %v132, %v128
    %v145 = vpack.c.b16 %v133, %v129
    %v146 = vpack.c.b16 %v134, %v130
    %v147 = vpack.c.b16 %v139, %v135
    %v148 = vpack.c.b16 %v140, %v136
    %v149 = vpack.c.b16 %v141, %v137
    %v150 = vpack.c.b16 %v142, %v138
    %v223 = vunpack.c.l.b16 %v51
    %v224 = vunpack.c.l.b16 %v52
    %v225 = vunpack.c.l.b16 %v53
    %v226 = vunpack.c.l.b16 %v54
    %v227 = vunpack.c.l.b16 %v55
    %v228 = vunpack.c.l.b16 %v56
    %v229 = vunpack.c.l.b16 %v57
    %v230 = vunpack.c.l.b16 %v58
    %v231 = vunpack.c.l.b16 %v59
    %v232 = vunpack.c.l.b16 %v60
    %v233 = vunpack.c.l.b16 %v61
    %v234 = vunpack.c.l.b16 %v62
    %v235 = vunpack.c.l.b16 %v63
    %v236 = vunpack.c.l.b16 %v64
    %v237 = vunpack.c.l.b16 %v65
    %v238 = vunpack.c.l.b16 %v66
    %v239 = vunpack.c.l.b16 %v67
    %v240 = vunpack.c.l.b16 %v68
    %v241 = vunpack.c.l.b16 %v69
    %v242 = vunpack.c.l.b16 %v70
    %v243 = vunpack.c.l.b16 %v71
    %v244 = vunpack.c.l.b16 %v72
    %v245 = vunpack.c.l.b16 %v73
    %v246 = vunpack.c.l.b16 %v74
    %v247 = vunpack.c.l.b16 %v75
    %v248 = vunpack.c.l.b16 %v76
    %v249 = vunpack.c.l.b16 %v77
    %v250 = vunpack.c.l.b16 %v78
    %v251 = vunpack.c.l.b16 %v79
    %v252 = vunpack.c.l.b16 %v80
    %v253 = vunpack.c.l.b16 %v81
    %v254 = vunpack.c.l.b16 %v82
    %v255 = vunpack.c.l.b16 %v83
    %v256 = vunpack.c.l.b16 %v84
    %v257 = vunpack.c.l.b16 %v85
    %v258 = vunpack.c.l.b16 %v86
    %v259 = vunpack.c.l.b16 %v87
    %v260 = vunpack.c.l.b16 %v88
    %v261 = vunpack.c.l.b16 %v89
    %v262 = vunpack.c.l.b16 %v90
    %v263 = vunpack.c.l.b16 %v91
    %v264 = vunpack.c.l.b16 %v92
    %v265 = vunpack.c.l.b16 %v93
    %v266 = vunpack.c.l.b16 %v94
    %v267 = vunpack.c.l.b16 %v95
    %v268 = vunpack.c.l.b16 %v96
    %v269 = vunpack.c.l.b16 %v97
    %v270 = vunpack.c.l.b16 %v98
    %v271 = vunpack.c.l.b16 %v99
    %v272 = vunpack.c.l.b16 %v100
    %v273 = vunpack.c.l.b16 %v101
    %v274 = vunpack.c.l.b16 %v102
    %v275 = vunpack.c.l.b16 %v103
    %v276 = vunpack.c.l.b16 %v104
    %v277 = vunpack.c.l.b16 %v105
    %v278 = vunpack.c.l.b16 %v106
    %v279 = vunpack.c.l.b16 %v107
    %v280 = vunpack.c.l.b16 %v108
    %v281 = vunpack.c.l.b16 %v109
    %v282 = vunpack.c.l.b16 %v110
    %v283 = vunpack.c.l.b16 %v111
    %v284 = vunpack.c.l.b16 %v112
    %v285 = vunpack.c.l.b16 %v113
    %v286 = vunpack.c.l.b16 %v114
    %v287 = vpack.c.b16 %v224, %v223
    %v288 = vpack.c.b16 %v226, %v225
    %v289 = vpack.c.b16 %v228, %v227
    %v290 = vpack.c.b16 %v230, %v229
    %v291 = vpack.c.b16 %v232, %v231
    %v292 = vpack.c.b16 %v234, %v233
    %v293 = vpack.c.b16 %v236, %v235
    %v294 = vpack.c.b16 %v238, %v237
    %v295 = vpack.c.b16 %v240, %v239
    %v296 = vpack.c.b16 %v242, %v241
    %v297 = vpack.c.b16 %v244, %v243
    %v298 = vpack.c.b16 %v246, %v245
    %v299 = vpack.c.b16 %v248, %v247
    %v300 = vpack.c.b16 %v250, %v249
    %v301 = vpack.c.b16 %v252, %v251
    %v302 = vpack.c.b16 %v254, %v253
    %v303 = vpack.c.b16 %v256, %v255
    %v304 = vpack.c.b16 %v258, %v257
    %v305 = vpack.c.b16 %v260, %v259
    %v306 = vpack.c.b16 %v262, %v261
    %v307 = vpack.c.b16 %v264, %v263
    %v308 = vpack.c.b16 %v266, %v265
    %v309 = vpack.c.b16 %v268, %v267
    %v310 = vpack.c.b16 %v270, %v269
    %v311 = vpack.c.b16 %v272, %v271
    %v312 = vpack.c.b16 %v274, %v273
    %v313 = vpack.c.b16 %v276, %v275
    %v314 = vpack.c.b16 %v278, %v277
    %v315 = vpack.c.b16 %v280, %v279
    %v316 = vpack.c.b16 %v282, %v281
    %v317 = vpack.c.b16 %v284, %v283
    %v318 = vpack.c.b16 %v286, %v285
    %351 = vmatpush.bf16.msra.mxu0 %v294
    %352 = vmatpush.bf16.msra.mxu0 %v293
    %353 = vmatpush.bf16.msra.mxu0 %v292
    %354 = vmatpush.bf16.msra.mxu0 %v291
    %355 = vmatpush.bf16.msra.mxu0 %v290
    %356 = vmatpush.bf16.msra.mxu0 %v289
    %357 = vmatpush.bf16.msra.mxu0 %v288
    %358 = vmatpush.bf16.msra.mxu0 %v287
    %359 = vmatmul.bf16.gmra.mxu0 %v143
    %v360 = vpop.f32.mrf.mxu0
    %v361 = vadd.f32 %v117, %v360
    %v362 = vpop.f32.mrf.mxu0
    %v363 = vadd.f32 %v117, %v362
    %364 = vmatmul.bf16.gmra.mxu0 %v147
    %v365 = vpop.f32.mrf.mxu0
    %v366 = vadd.f32 %v117, %v365
    %v367 = vpop.f32.mrf.mxu0
    %v368 = vadd.f32 %v117, %v367
    %369 = vdwg.mxu0
    %370 = vmatpush.bf16.msra.mxu0 %v302
    %371 = vmatpush.bf16.msra.mxu0 %v301
    %372 = vmatpush.bf16.msra.mxu0 %v300
    %373 = vmatpush.bf16.msra.mxu0 %v299
    %374 = vmatpush.bf16.msra.mxu0 %v298
    %375 = vmatpush.bf16.msra.mxu0 %v297
    %376 = vmatpush.bf16.msra.mxu0 %v296
    %377 = vmatpush.bf16.msra.mxu0 %v295
    %378 = vmatmul.bf16.gmra.mxu0 %v144
    %v379 = vpop.f32.mrf.mxu0
    %v380 = vadd.f32 %v361, %v379
    %v381 = vpop.f32.mrf.mxu0
    %v382 = vadd.f32 %v363, %v381
    %383 = vmatmul.bf16.gmra.mxu0 %v148
    %v384 = vpop.f32.mrf.mxu0
    %v385 = vadd.f32 %v366, %v384
    %v386 = vpop.f32.mrf.mxu0
    %v387 = vadd.f32 %v368, %v386
    %388 = vdwg.mxu0
    %389 = vmatpush.bf16.msra.mxu0 %v310
    %390 = vmatpush.bf16.msra.mxu0 %v309
    %391 = vmatpush.bf16.msra.mxu0 %v308
    %392 = vmatpush.bf16.msra.mxu0 %v307
    %393 = vmatpush.bf16.msra.mxu0 %v306
    %394 = vmatpush.bf16.msra.mxu0 %v305
    %395 = vmatpush.bf16.msra.mxu0 %v304
    %396 = vmatpush.bf16.msra.mxu0 %v303
    %397 = vmatmul.bf16.gmra.mxu0 %v145
    %v398 = vpop.f32.mrf.mxu0
    %v399 = vadd.f32 %v380, %v398
    %v400 = vpop.f32.mrf.mxu0
    %v401 = vadd.f32 %v382, %v400
    %402 = vmatmul.bf16.gmra.mxu0 %v149
    %v403 = vpop.f32.mrf.mxu0
    %v404 = vadd.f32 %v385, %v403
    %v405 = vpop.f32.mrf.mxu0
    %v406 = vadd.f32 %v387, %v405
    %407 = vdwg.mxu0
    %408 = vmatpush.bf16.msra.mxu0 %v318
    %409 = vmatpush.bf16.msra.mxu0 %v317
    %410 = vmatpush.bf16.msra.mxu0 %v316
    %411 = vmatpush.bf16.msra.mxu0 %v315
    %412 = vmatpush.bf16.msra.mxu0 %v314
    %413 = vmatpush.bf16.msra.mxu0 %v313
    %414 = vmatpush.bf16.msra.mxu0 %v312
    %415 = vmatpush.bf16.msra.mxu0 %v311
    %416 = vmatmul.bf16.gmra.mxu0 %v146
    %v417 = vpop.f32.mrf.mxu0
    %v418 = vadd.f32 %v399, %v417
    %v419 = vpop.f32.mrf.mxu0
    %v420 = vadd.f32 %v401, %v419
    %421 = vmatmul.bf16.gmra.mxu0 %v150
    %v422 = vpop.f32.mrf.mxu0
    %v423 = vadd.f32 %v404, %v422
    %v424 = vpop.f32.mrf.mxu0
    %v425 = vadd.f32 %v406, %v424
    %426 = vdwg.mxu0
    %v427 = vlaneseq
    %v428 = vand.u32 %v427, 127
    %vm429 = vcmp.eq.s32.totalorder %v428, 47
    %v430 = vsel %vm429, %v418, 0.0
    %v431 = vsel %vm429, %v420, 0.0
    %v432 = vsel %vm429, %v423, 0.0
    %v433 = vsel %vm429, %v425, 0.0
    %434 = vadd.xlane.f32.xlu0 %v430
    %v435 = vpop.xlane.xlu0 %434
    %436 = vadd.xlane.f32.xlu0 %v431
    %v437 = vpop.xlane.xlu0 %436
    %438 = vadd.xlane.f32.xlu0 %v432
    %v439 = vpop.xlane.xlu0 %438
    %440 = vadd.xlane.f32.xlu0 %v433
    %v441 = vpop.xlane.xlu0 %440
    %v442 = vmul.f32 %v418, %v39
    %v443 = vmul.f32 %v420, %v40
    %v444 = vmul.f32 %v423, %v41
    %v445 = vmul.f32 %v425, %v42
    %446 = vadd.xlane.f32.xlu0 %v442
    %v447 = vpop.xlane.xlu0 %446
    %448 = vadd.xlane.f32.xlu0 %v443
    %v449 = vpop.xlane.xlu0 %448
    %450 = vadd.xlane.f32.xlu0 %v444
    %v451 = vpop.xlane.xlu0 %450
    %452 = vadd.xlane.f32.xlu0 %v445
    %v453 = vpop.xlane.xlu0 %452
    %454 = vadd.xlane.f32.xlu0 %v39
    %v455 = vpop.xlane.xlu0 %454
    %456 = vadd.xlane.f32.xlu0 %v40
    %v457 = vpop.xlane.xlu0 %456
    %458 = vadd.xlane.f32.xlu0 %v41
    %v459 = vpop.xlane.xlu0 %458
    %460 = vadd.xlane.f32.xlu0 %v42
    %v461 = vpop.xlane.xlu0 %460
    %v462 = vmax.f32 %v455, 1.0
    %v463 = vmax.f32 %v457, 1.0
    %v464 = vmax.f32 %v459, 1.0
    %v465 = vmax.f32 %v461, 1.0
    %v466 = vrcp.pop %v462
    %v467 = vrcp.pop %v463
    %v468 = vrcp.pop %v464
    %v469 = vrcp.pop %v465
    %v470 = vmul.f32 %v447, %v466
    %v471 = vmul.f32 %v449, %v467
    %v472 = vmul.f32 %v451, %v468
    %v473 = vmul.f32 %v453, %v469
    %v474 = vadd.f32 %v435, %v418
    %v475 = vadd.f32 %v437, %v420
    %v476 = vadd.f32 %v439, %v423
    %v477 = vadd.f32 %v441, %v425
    %v478 = vsub.f32 %v474, %v470
    %v479 = vsub.f32 %v475, %v471
    %v480 = vsub.f32 %v476, %v472
    %v481 = vsub.f32 %v477, %v473
    %vm482 = vcmp.gt.f32.partialorder %v39, 0.0
    %vm483 = vcmp.gt.f32.partialorder %v40, 0.0
    %vm484 = vcmp.gt.f32.partialorder %v41, 0.0
    %vm485 = vcmp.gt.f32.partialorder %v42, 0.0
    %v486 = vsel %vm482, %v478, -inf
    %v487 = vsel %vm483, %v479, -inf
    %v488 = vsel %vm484, %v480, -inf
    %v489 = vsel %vm485, %v481, -inf
    %490 = vst [vmem:[#allocation5] sm:$0xff] %v486
    %491 = vst [vmem:[#allocation5 + $0x8] sm:$0xff] %v487
    %492 = vst [vmem:[#allocation5 + $0x10] sm:$0xff] %v488
    %493 = vst [vmem:[#allocation5 + $0x18] sm:$0xff] %v489
    // Predicated region
    $region22: #{dqn_forward.1} parent=1 // pred_check
      _
    $region23: #{dqn_forward.1} parent=1 // pred_check_branch
      %495 = sbr.rel (0) target = $region25
    $region24: #{dqn_forward.1} parent=1 // pred_region
      %497 = vsyncadd [#allocation4], 0
      %s498 = sshll.u32 [#allocation5], 4
      %s499 = int_to_ptr.vmem [resolvable:$true] %s498
      %s500 = sshll.u32 %s4, 4
      %s501 = int_to_ptr.hbm [resolvable:$true] %s500
      %506 = dma.vmem_to_hbm [thread:$0]  %s499, 512, %s501, [#allocation4], 128, 128, 8
    $region25: #{dqn_forward.1} parent=1 // pred_fallthru
      _
    // Predicated region
    $region26: #{dqn_forward.1} parent=1 // pred_check
      _
    $region27: #{dqn_forward.1} parent=1 // pred_check_branch
      %508 = sbr.rel (0) target = $region29
    $region28: #{dqn_forward.1} parent=1 // pred_region
      %510 = dma.done [#allocation4], 512
    $region29: #{dqn_forward.1} parent=1 // pred_fallthru
      _
    %511 = vsyncpa [#allocation3], 1
    %512 = vsyncpa [#allocation4], 1

</llo_original>
